<compile_context>
chip_gen: v7x
topology: tpu7x:2x2x1
jax: 0.10.0
libtpu: 0.0.40
codegen_flags: <defaults>
</compile_context>

<pallas_src>
import functools
import math

import jax
import jax.numpy as jnp
from jax.experimental import pallas as pl
from jax.experimental.pallas import tpu as pltpu


_MIN_TOTAL_STEPS = 8  # >= 2 TensorCores (v7x) x ~4 steps so DMA fill/drain hides


def _cdiv(a: int, b: int) -> int:
    return -(-a // b)


# ----------------------------------------------------------------------------
# Kernel
# ----------------------------------------------------------------------------
def _rope_kernel(*refs, head_dim: int, fold: int, n_tensors: int):
    """refs = (cos, sin_signed, x_0..x_{n-1}, o_0..o_{n-1}).

    Blocks are "lane-folded": the last axis L = fold * head_dim packs `fold`
    consecutive positions into the lane dimension (L is a multiple of 128
    whenever gcd(head_dim, 128) > 1 and the sequence length allows it).

      cos/sin_signed : (S_t, L)   input dtype (sin first-halves pre-negated)
      x_i / o_i      : (H_i, S_t, L)
    """
    cos_ref, sin_ref = refs[0], refs[1]
    x_refs = refs[2:2 + n_tensors]
    o_refs = refs[2 + n_tensors:]

    half = head_dim // 2
    lanes = cos_ref.shape[-1]

    # f32 in-register compute: >= PyTorch precision (identical for f32 inputs),
    # and required on v5e (no bf16 VALU/EUP).
    cos = cos_ref[...].astype(jnp.float32)[None]           # (1, S_t, L)
    sin = sin_ref[...].astype(jnp.float32)[None]           # sign already folded

    if fold > 1:
        # Chunk-local half mask, hoisted out of the per-tensor loop.
        lane = jax.lax.broadcasted_iota(jnp.int32, (1, 1, lanes), 2)
        first_half = (lane % head_dim) < half

    # pltpu.roll follows jnp.roll semantics: roll(x, s)[j] = x[(j - s) % lanes].
    for x_ref, o_ref in zip(x_refs, o_refs):
        x = x_ref[...].astype(jnp.float32)                  # (H, S_t, L)
        if fold == 1:
            # Full-lane circular roll by half IS rotate_half magnitude-wise.
            swapped = pltpu.roll(x, half, axis=2)
        else:
            x_ahead = pltpu.roll(x, lanes - half, axis=2)   # x[..., j + half]
            x_behind = pltpu.roll(x, half, axis=2)          # x[..., j - half]
            swapped = jnp.where(first_half, x_ahead, x_behind)
        o_ref[...] = (x * cos + swapped * sin).astype(o_ref.dtype)


# ----------------------------------------------------------------------------
# Wrapper
# ----------------------------------------------------------------------------
def _vmem_params():
    """(per-step tile budget, vmem_limit_bytes) derived from this chip's VMEM."""
    vmem_cap = 64 * 1024 * 1024                 # conservative default = v7x per-TC
    try:
        cap = getattr(pltpu.get_tpu_info(), "vmem_capacity_bytes", None)
        if cap:
            vmem_cap = int(cap)
    except Exception:
        pass
    budget = vmem_cap // 4                      # 16 MiB on v7x, 32 MiB on v5e/v6e
    limit = min((vmem_cap * 3) // 4, 100 * 1024 * 1024)
    return budget, limit


def _fold_factor(seq_len: int, head_dim: int) -> int:
    """Smallest #positions folded into the lane axis so lanes % 128 == 0."""
    k = 128 // math.gcd(head_dim, 128)
    if k > 1 and seq_len % k != 0:
        # TODO(synk): pad the sequence (or fold across heads) so lanes stay a
        # multiple of 128; falls back to (possibly masked) head_dim lanes.
        return 1
    return k


def _pick_seq_tile(s_f: int, batch: int, per_row_bytes: int, budget_bytes: int) -> int:
    """Folded-seq tile: multiple of 8, within VMEM budget, >= ~8 total grid steps."""
    if s_f <= 8:
        return s_f                               # block == full dim (always legal)
    by_budget = max(8, (budget_bytes // max(per_row_bytes, 1)) // 8 * 8)
    seq_steps = _cdiv(_MIN_TOTAL_STEPS, max(batch, 1))
    by_steps = max(8, _cdiv(_cdiv(s_f, seq_steps), 8) * 8)
    return min(by_budget, by_steps, _cdiv(s_f, 8) * 8)


def apply_rope_pallas(xs, cos, sin_signed, *, donate_inputs: bool = False):
    """Apply RoPE to every x in `xs` (each (B, H_i, S, D)), sharing cos / signed sin (B, S, D)."""
    xs = tuple(xs)
    B, _, S, D = xs[0].shape
    assert D % 2 == 0
    for x in xs:
        assert x.shape[0] == B and x.shape[2] == S and x.shape[3] == D
    assert cos.shape == (B, S, D) and sin_signed.shape == (B, S, D)

    fold = _fold_factor(S, D)
    s_f, lanes = S // fold, fold * D

    xs_f = tuple(x.reshape(B, x.shape[1], s_f, lanes) for x in xs)   # pure reshapes
    cos_f = cos.reshape(B, s_f, lanes)
    sin_f = sin_signed.reshape(B, s_f, lanes)

    budget, vmem_limit = _vmem_params()
    cs_bytes = jnp.dtype(cos.dtype).itemsize
    per_row = 4 * lanes * cs_bytes                                          # cos+sin, dbuf
    per_row += sum(4 * x.shape[1] * lanes * x.dtype.itemsize for x in xs)   # x in+out, dbuf
    per_row += sum(4 * x.shape[1] * lanes * 4 for x in xs)                  # f32 temporaries headroom
    s_t = _pick_seq_tile(s_f, B, per_row, budget)
    grid = (B, _cdiv(s_f, s_t))                  # cdiv grid: partial last block OK

    cs_spec = pl.BlockSpec((pl.Squeezed(), s_t, lanes), lambda b, s: (b, s, 0))
    x_specs = tuple(
        pl.BlockSpec((pl.Squeezed(), x.shape[1], s_t, lanes),
                     lambda b, s: (b, 0, s, 0))
        for x in xs)
    out_shapes = tuple(
        jax.ShapeDtypeStruct((B, x.shape[1], s_f, lanes), x.dtype) for x in xs)

    # Optional in-place update (input i+2 -> output i) for callers that discard
    # the un-rotated q/k; off by default so inputs stay valid for reuse.
    aliases = {2 + i: i for i in range(len(xs))} if donate_inputs else {}

    outs = pl.pallas_call(
        functools.partial(_rope_kernel, head_dim=D, fold=fold, n_tensors=len(xs)),
        out_shape=out_shapes,
        grid=grid,
        in_specs=[cs_spec, cs_spec, *x_specs],
        out_specs=x_specs,
        input_output_aliases=aliases,
        compiler_params=pltpu.CompilerParams(
            dimension_semantics=("parallel", "parallel"),
            vmem_limit_bytes=vmem_limit),
    )(cos_f, sin_f, *xs_f)

    if not isinstance(outs, (tuple, list)):
        outs = (outs,)
    return tuple(o.reshape(x.shape) for o, x in zip(outs, xs))


def _swap_halves(x):
    """|rotate_half|: concat([x2, x1]) — sign lives in the pre-signed sin."""
    half = x.shape[-1] // 2
    return jnp.concatenate([x[..., half:], x[..., :half]], axis=-1)


# ----------------------------------------------------------------------------
# Module (JAX port of the PyTorch YarnRotaryEmbedding)
# ----------------------------------------------------------------------------
class YarnRotaryEmbedding:

    def __init__(self, dim, max_position_embeddings=2048, base=10000,
                 scaling_factor=1.0, beta_slow=2, beta_fast=128):
        self.base = base
        self.dim = dim
        self.scaling_factor = scaling_factor
        self.beta_slow = beta_slow
        self.beta_fast = beta_fast
        self.max_position_embeddings = max_position_embeddings
        self._set_cos_sin_cache(
            seq_len=math.ceil(max_position_embeddings * scaling_factor))

    def _get_factor(self):
        fast_dim = self.dim / 2 * (math.log(self.max_position_embeddings /
                                            (2 * math.pi * self.beta_fast))
                                   / math.log(self.base))
        fast_dim = max(math.floor(fast_dim), 0)
        slow_dim = self.dim / 2 * (math.log(self.max_position_embeddings /
                                            (2 * math.pi * self.beta_slow))
                                   / math.log(self.base))
        slow_dim = min(math.ceil(slow_dim), self.dim - 1)
        if fast_dim == slow_dim:
            slow_dim += 0.001
        dim_arange = jnp.arange(0, self.dim // 2, dtype=jnp.float32)
        dim_factor = jnp.clip((dim_arange - fast_dim) / (slow_dim - fast_dim), 0, 1)
        return 1 - dim_factor

    def _get_temperature(self):
        if self.scaling_factor <= 1:
            return 1.0
        return 0.07 * math.log(self.scaling_factor) + 1.0

    def _set_cos_sin_cache(self, seq_len):
        dim_arange = jnp.arange(0, self.dim, 2, dtype=jnp.float32) / self.dim
        freq = self.base ** dim_arange
        theta = 1.0 / freq
        interleave_theta = theta / self.scaling_factor
        factor = self._get_factor()
        yarn_theta = factor * theta + (1 - factor) * interleave_theta
        self.inv_freq = yarn_theta
        t = jnp.arange(seq_len, dtype=jnp.float32)
        freqs = jnp.outer(t, self.inv_freq)
        emb = jnp.concatenate([freqs, freqs], axis=-1)          # (seq_len, dim)
        temperature = self._get_temperature()
        self.cos_cached = jnp.cos(emb) * temperature            # f32 cache
        self.sin_cached = jnp.sin(emb) * temperature
        # rotate_half's minus sign pre-folded into sin (first half negated) so
        # the kernel needs no per-step iota / sign-select.
        half = self.dim // 2
        self.sin_signed_cached = jnp.concatenate(
            [-self.sin_cached[:, :half], self.sin_cached[:, half:]], axis=-1)
        self.max_seq_len_cached = seq_len

    def __call__(self, q, k, position_ids):
        # Dynamic YaRN re-cache (PyTorch branch), eager mode only: under jit the
        # .max() readback would force a device->host sync / break tracing, so
        # there we rely on the cache precomputed at construction time.
        # TODO(synk): expose an explicit static seq_len argument for jit callers
        # (jnp.take clamps out-of-range position_ids silently).
        try:
            seq_len = max(int(position_ids.max()) + 1, k.shape[2])
        except Exception:
            seq_len = None
        if seq_len is not None and seq_len > self.max_seq_len_cached:
            self.scaling_factor = seq_len / self.max_position_embeddings
            self._set_cos_sin_cache(seq_len)

        # Per-position cos / sign-folded sin: (B, S_k, D) in the INPUT dtype
        # (PyTorch also casts to k.dtype); shared across heads in-kernel.
        k_cos = jnp.take(self.cos_cached, position_ids, axis=0).astype(k.dtype)
        k_sin = jnp.take(self.sin_signed_cached, position_ids, axis=0).astype(k.dtype)

        s_q, s_k = q.shape[2], k.shape[2]
        if s_q == s_k:
            # Fused path: one pallas_call rotates q and k sharing cos/sin tiles.
            q_embed, k_embed = apply_rope_pallas((q, k), k_cos, k_sin)
        else:
            # Decode-style: q positions are the contiguous suffix of k positions
            # (contract inherited from the PyTorch module).
            (k_embed,) = apply_rope_pallas((k,), k_cos, k_sin)
            if s_q <= 32:
                # Tiny q: a dedicated pallas_call is pure launch overhead.
                q_cos = k_cos[:, -s_q:, :][:, None].astype(jnp.float32)
                q_sin = k_sin[:, -s_q:, :][:, None].astype(jnp.float32)
                q32 = q.astype(jnp.float32)
                q_embed = (q32 * q_cos + _swap_halves(q32) * q_sin).astype(q.dtype)
            else:
                (q_embed,) = apply_rope_pallas(
                    (q,), k_cos[:, -s_q:, :], k_sin[:, -s_q:, :])
        return q_embed, k_embed


# ----------------------------------------------------------------------------
# Pure-JAX reference (mirrors the PyTorch forward exactly) + self-check
# ----------------------------------------------------------------------------
def _rotate_half(x):
    half = x.shape[-1] // 2
    return jnp.concatenate([-x[..., half:], x[..., :half]], axis=-1)


def _reference_forward(rope, q, k, position_ids):
    k_cos = jnp.take(rope.cos_cached, position_ids, axis=0).astype(k.dtype)[:, None]
    k_sin = jnp.take(rope.sin_cached, position_ids, axis=0).astype(k.dtype)[:, None]
    q_cos = k_cos[..., -q.shape[2]:, :]
    q_sin = k_sin[..., -q.shape[2]:, :]
    q_embed = q * q_cos + _rotate_half(q) * q_sin
    k_embed = k * k_cos + _rotate_half(k) * k_sin
    return q_embed, k_embed


if __name__ == "__main__":
    key = jax.random.PRNGKey(0)
    k1, k2, k3 = jax.random.split(key, 3)

    B, H, S, D = 2, 4, 8, 32
    q = jax.random.normal(k1, (B, H, S, D), dtype=jnp.float32)
    k = jax.random.normal(k2, (B, H, S, D), dtype=jnp.float32)
    position_ids = jnp.tile(jnp.arange(S, dtype=jnp.int32)[None, :], (B, 1))

    # scaling_factor > 1 exercises the YaRN interpolation + temperature path.
    rope = YarnRotaryEmbedding(dim=D, max_position_embeddings=32,
                               base=10000, scaling_factor=2.0)

    # --- prefill path (fused q+k pallas_call) ---
    q_embed, k_embed = rope(q, k, position_ids)
    jax.block_until_ready((q_embed, k_embed))
    q_ref, k_ref = _reference_forward(rope, q, k, position_ids)
    assert q_embed.shape == q.shape and k_embed.shape == k.shape
    assert q_embed.dtype == q.dtype and k_embed.dtype == k.dtype
    assert jnp.allclose(q_embed, q_ref, atol=1e-5, rtol=1e-5)
    assert jnp.allclose(k_embed, k_ref, atol=1e-5, rtol=1e-5)

    # --- decode path (s_q=1 != s_k: k via pallas, tiny q via XLA) ---
    q_dec = jax.random.normal(k3, (B, H, 1, D), dtype=jnp.float32)
    qd_embed, kd_embed = rope(q_dec, k, position_ids)
    jax.block_until_ready((qd_embed, kd_embed))
    qd_ref, kd_ref = _reference_forward(rope, q_dec, k, position_ids)
    assert jnp.allclose(qd_embed, qd_ref, atol=1e-5, rtol=1e-5)
    assert jnp.allclose(kd_embed, kd_ref, atol=1e-5, rtol=1e-5)

    print("KERNEL_OK")
</pallas_src>

<mosaic_0001>
module attributes {stable_mosaic.version = 11 : i64} {
  func.func @_rope_kernel(%arg0: i32, %arg1: i32, %arg2: memref<1x2x128xf32, #tpu.memory_space<vmem>>, %arg3: memref<1x2x128xf32, #tpu.memory_space<vmem>>, %arg4: memref<1x4x2x128xf32, #tpu.memory_space<vmem>>, %arg5: memref<1x4x2x128xf32, #tpu.memory_space<vmem>>, %arg6: memref<1x4x2x128xf32, #tpu.memory_space<vmem>>, %arg7: memref<1x4x2x128xf32, #tpu.memory_space<vmem>>) attributes {dimension_semantics = [#tpu.dimension_semantics<parallel>, #tpu.dimension_semantics<parallel>], iteration_bounds = array<i64: 2, 1>, scalar_prefetch = 0 : i64, scratch_operands = 0 : i64, tpu.core_type = #tpu.core_type<tc>, window_params = [{transform_indices = @transform_0, window_bounds = array<i64: 1, 2, 128>}, {transform_indices = @transform_1, window_bounds = array<i64: 1, 2, 128>}, {transform_indices = @transform_2, window_bounds = array<i64: 1, 4, 2, 128>}, {transform_indices = @transform_3, window_bounds = array<i64: 1, 4, 2, 128>}, {transform_indices = @transform_4, window_bounds = array<i64: 1, 4, 2, 128>}, {transform_indices = @transform_5, window_bounds = array<i64: 1, 4, 2, 128>}]} {
    %c0 = arith.constant 0 : index
    %c0_0 = arith.constant 0 : index
    %c0_1 = arith.constant 0 : index
    %0 = vector.load %arg2[%c0, %c0_0, %c0_1] : memref<1x2x128xf32, #tpu.memory_space<vmem>>, vector<1x2x128xf32>
    %1 = vector.shape_cast %0 : vector<1x2x128xf32> to vector<2x128xf32>
    %2 = vector.shape_cast %1 : vector<2x128xf32> to vector<1x2x128xf32>
    %c0_2 = arith.constant 0 : index
    %c0_3 = arith.constant 0 : index
    %c0_4 = arith.constant 0 : index
    %3 = vector.load %arg3[%c0_2, %c0_3, %c0_4] : memref<1x2x128xf32, #tpu.memory_space<vmem>>, vector<1x2x128xf32>
    %4 = vector.shape_cast %3 : vector<1x2x128xf32> to vector<2x128xf32>
    %5 = vector.shape_cast %4 : vector<2x128xf32> to vector<1x2x128xf32>
    %6 = tpu.iota {dimensions = array<i32: 2>} : vector<1x1x128xi32>
    %c32_i32 = arith.constant 32 : i32
    %c0_i32 = arith.constant 0 : i32
    %7 = arith.cmpi eq, %c32_i32, %c0_i32 : i32
    %c1_i32 = arith.constant 1 : i32
    %8 = arith.select %7, %c1_i32, %c32_i32 : i32
    %9 = vector.broadcast %8 : i32 to vector<1x1x128xi32>
    %10 = arith.remsi %6, %9 : vector<1x1x128xi32>
    %c0_i32_5 = arith.constant 0 : i32
    %11 = vector.broadcast %c0_i32_5 : i32 to vector<1x1x128xi32>
    %12 = arith.cmpi ne, %10, %11 : vector<1x1x128xi32>
    %c0_i32_6 = arith.constant 0 : i32
    %13 = vector.broadcast %c0_i32_6 : i32 to vector<1x1x128xi32>
    %14 = arith.cmpi slt, %10, %13 : vector<1x1x128xi32>
    %c0_i32_7 = arith.constant 0 : i32
    %15 = arith.cmpi slt, %8, %c0_i32_7 : i32
    %16 = vector.broadcast %15 : i1 to vector<1x1x128xi1>
    %17 = vector.broadcast %16 : vector<1x1x128xi1> to vector<1x1x128xi1>
    %18 = arith.xori %14, %17 : vector<1x1x128xi1>
    %19 = arith.andi %18, %12 : vector<1x1x128xi1>
    %20 = vector.broadcast %8 : i32 to vector<1x1x128xi32>
    %21 = arith.addi %10, %20 : vector<1x1x128xi32>
    %22 = arith.select %19, %21, %10 : vector<1x1x128xi1>, vector<1x1x128xi32>
    %c16_i32 = arith.constant 16 : i32
    %23 = vector.broadcast %c16_i32 : i32 to vector<1x1x128xi32>
    %24 = arith.cmpi slt, %22, %23 : vector<1x1x128xi32>
    %c0_8 = arith.constant 0 : index
    %c0_9 = arith.constant 0 : index
    %c0_10 = arith.constant 0 : index
    %c0_11 = arith.constant 0 : index
    %25 = vector.load %arg4[%c0_8, %c0_9, %c0_10, %c0_11] : memref<1x4x2x128xf32, #tpu.memory_space<vmem>>, vector<1x4x2x128xf32>
    %26 = vector.shape_cast %25 : vector<1x4x2x128xf32> to vector<4x2x128xf32>
    %c112_i32 = arith.constant 112 : i32
    %27 = tpu.dynamic_rotate %26 by %c112_i32 dim 2 : vector<4x2x128xf32>, i32 -> vector<4x2x128xf32>
    %c16_i32_12 = arith.constant 16 : i32
    %28 = tpu.dynamic_rotate %26 by %c16_i32_12 dim 2 : vector<4x2x128xf32>, i32 -> vector<4x2x128xf32>
    %29 = vector.shape_cast %24 : vector<1x1x128xi1> to vector<1x1x128xi1>
    %30 = vector.broadcast %29 : vector<1x1x128xi1> to vector<4x2x128xi1>
    %31 = arith.select %30, %27, %28 : vector<4x2x128xi1>, vector<4x2x128xf32>
    %32 = vector.broadcast %2 : vector<1x2x128xf32> to vector<4x2x128xf32>
    %33 = arith.mulf %26, %32 : vector<4x2x128xf32>
    %34 = vector.broadcast %5 : vector<1x2x128xf32> to vector<4x2x128xf32>
    %35 = arith.mulf %31, %34 : vector<4x2x128xf32>
    %36 = arith.addf %33, %35 : vector<4x2x128xf32>
    %c0_13 = arith.constant 0 : index
    %c0_14 = arith.constant 0 : index
    %c0_15 = arith.constant 0 : index
    %c0_16 = arith.constant 0 : index
    %37 = vector.load %arg6[%c0_13, %c0_14, %c0_15, %c0_16] : memref<1x4x2x128xf32, #tpu.memory_space<vmem>>, vector<1x4x2x128xf32>
    %38 = vector.shape_cast %37 : vector<1x4x2x128xf32> to vector<4x2x128xf32>
    %39 = vector.shape_cast %36 : vector<4x2x128xf32> to vector<1x4x2x128xf32>
    tpu.vector_store %arg6[%c0_13, %c0_14, %c0_15, %c0_16], %39 {strides = array<i32>} : memref<1x4x2x128xf32, #tpu.memory_space<vmem>>, vector<1x4x2x128xf32>,
    %c0_17 = arith.constant 0 : index
    %c0_18 = arith.constant 0 : index
    %c0_19 = arith.constant 0 : index
    %c0_20 = arith.constant 0 : index
    %40 = vector.load %arg5[%c0_17, %c0_18, %c0_19, %c0_20] : memref<1x4x2x128xf32, #tpu.memory_space<vmem>>, vector<1x4x2x128xf32>
    %41 = vector.shape_cast %40 : vector<1x4x2x128xf32> to vector<4x2x128xf32>
    %c112_i32_21 = arith.constant 112 : i32
    %42 = tpu.dynamic_rotate %41 by %c112_i32_21 dim 2 : vector<4x2x128xf32>, i32 -> vector<4x2x128xf32>
    %c16_i32_22 = arith.constant 16 : i32
    %43 = tpu.dynamic_rotate %41 by %c16_i32_22 dim 2 : vector<4x2x128xf32>, i32 -> vector<4x2x128xf32>
    %44 = vector.shape_cast %24 : vector<1x1x128xi1> to vector<1x1x128xi1>
    %45 = vector.broadcast %44 : vector<1x1x128xi1> to vector<4x2x128xi1>
    %46 = arith.select %45, %42, %43 : vector<4x2x128xi1>, vector<4x2x128xf32>
    %47 = vector.broadcast %2 : vector<1x2x128xf32> to vector<4x2x128xf32>
    %48 = arith.mulf %41, %47 : vector<4x2x128xf32>
    %49 = vector.broadcast %5 : vector<1x2x128xf32> to vector<4x2x128xf32>
    %50 = arith.mulf %46, %49 : vector<4x2x128xf32>
    %51 = arith.addf %48, %50 : vector<4x2x128xf32>
    %c0_23 = arith.constant 0 : index
    %c0_24 = arith.constant 0 : index
    %c0_25 = arith.constant 0 : index
    %c0_26 = arith.constant 0 : index
    %52 = vector.load %arg7[%c0_23, %c0_24, %c0_25, %c0_26] : memref<1x4x2x128xf32, #tpu.memory_space<vmem>>, vector<1x4x2x128xf32>
    %53 = vector.shape_cast %52 : vector<1x4x2x128xf32> to vector<4x2x128xf32>
    %54 = vector.shape_cast %51 : vector<4x2x128xf32> to vector<1x4x2x128xf32>
    tpu.vector_store %arg7[%c0_23, %c0_24, %c0_25, %c0_26], %54 {strides = array<i32>} : memref<1x4x2x128xf32, #tpu.memory_space<vmem>>, vector<1x4x2x128xf32>,
    return
  }
  func.func @transform_0(%arg0: i32, %arg1: i32) -> (i32, i32, i32) {
    %c0_i32 = arith.constant 0 : i32
    %c0_i32_0 = arith.constant 0 : i32
    return %arg0, %arg1, %c0_i32 : i32, i32, i32
  }
  func.func @transform_1(%arg0: i32, %arg1: i32) -> (i32, i32, i32) {
    %c0_i32 = arith.constant 0 : i32
    %c0_i32_0 = arith.constant 0 : i32
    return %arg0, %arg1, %c0_i32 : i32, i32, i32
  }
  func.func @transform_2(%arg0: i32, %arg1: i32) -> (i32, i32, i32, i32) {
    %c0_i32 = arith.constant 0 : i32
    %c0_i32_0 = arith.constant 0 : i32
    %c0_i32_1 = arith.constant 0 : i32
    return %arg0, %c0_i32, %arg1, %c0_i32_0 : i32, i32, i32, i32
  }
  func.func @transform_3(%arg0: i32, %arg1: i32) -> (i32, i32, i32, i32) {
    %c0_i32 = arith.constant 0 : i32
    %c0_i32_0 = arith.constant 0 : i32
    %c0_i32_1 = arith.constant 0 : i32
    return %arg0, %c0_i32, %arg1, %c0_i32_0 : i32, i32, i32, i32
  }
  func.func @transform_4(%arg0: i32, %arg1: i32) -> (i32, i32, i32, i32) {
    %c0_i32 = arith.constant 0 : i32
    %c0_i32_0 = arith.constant 0 : i32
    %c0_i32_1 = arith.constant 0 : i32
    return %arg0, %c0_i32, %arg1, %c0_i32_0 : i32, i32, i32, i32
  }
  func.func @transform_5(%arg0: i32, %arg1: i32) -> (i32, i32, i32, i32) {
    %c0_i32 = arith.constant 0 : i32
    %c0_i32_0 = arith.constant 0 : i32
    %c0_i32_1 = arith.constant 0 : i32
    return %arg0, %c0_i32, %arg1, %c0_i32_0 : i32, i32, i32, i32
  }
}

</mosaic_0001>

<llo_original>
// kernel: tpu_custom_call.1
$region0: #{tpu_custom_call.1}
  #allocation0 [shape = 'u32[]', space=smem, size = 0x4, offset = 0x4, fixed_abs, tag = 'smem constant byte address 0x4 - core index']
  #allocation1 [shape = 'u32[144,128]{1,0:T(1,128)}', space=vmem, size = 0x12000, scoped, tag = 'internal scratch']
  %s0 = inlined_call_operand.hbm [shape: f32[2,2,128], index: 0, kind: input, shape index: {}]
  %s1 = inlined_call_operand.hbm [shape: f32[2,2,128], index: 1, kind: input, shape index: {}]
  %s2 = inlined_call_operand.hbm [shape: f32[2,4,2,128], index: 2, kind: input, shape index: {}]
  %s3 = inlined_call_operand.hbm [shape: f32[2,4,2,128], index: 3, kind: input, shape index: {}]
  %s4 = inlined_call_operand.hbm [shape: f32[2,4,2,128], index: 4, kind: output, shape index: {0}]
  %s5 = inlined_call_operand.hbm [shape: f32[2,4,2,128], index: 5, kind: output, shape index: {1}]
  %6 = xla_tuple %s4, %s5
  %s7 = sld [smem:[#allocation0]]
  $region73: #{tpu_custom_call.1} parent=0
    _
  %s9 = ssub.s32 1, %s7
  %s10 = scalar_select 0, %s9, %s7
  $region1: #{tpu_custom_call.1} parent=0
    #allocation2 [shape = 'u8[2048]{0}', space=vmem, size = 0x800, scoped, tag = 'input window, operand 0']
    #allocation3 [shape = 's32[2]{0}', space=sflag, size = 0x8, scoped, tag = 'scoped memory for tpu_custom_call.1']
    #allocation4 [shape = 's32[2]{0}', space=sflag, size = 0x8, scoped, tag = 'scoped memory for tpu_custom_call.1']
    #allocation5 [shape = 'u8[2048]{0}', space=vmem, size = 0x800, scoped, tag = 'input window, operand 1']
    #allocation6 [shape = 's32[2]{0}', space=sflag, size = 0x8, scoped, tag = 'scoped memory for tpu_custom_call.1']
    #allocation7 [shape = 'u8[8192]{0}', space=vmem, size = 0x2000, scoped, tag = 'input window, operand 2']
    #allocation8 [shape = 'u8[8192]{0}', space=vmem, size = 0x2000, scoped, tag = 'input window, operand 3']
    #allocation9 [shape = 's32[2]{0}', space=sflag, size = 0x8, scoped, tag = 'scoped memory for tpu_custom_call.1']
    #allocation10 [shape = 'u8[8192]{0}', space=vmem, size = 0x2000, scoped, tag = 'output window, operand 0']
    #allocation11 [shape = 'u8[8192]{0}', space=vmem, size = 0x2000, scoped, tag = 'output window, operand 1']
    #allocation12 [shape = 's32[2]{0}', space=sflag, size = 0x8, scoped, tag = 'scoped memory for tpu_custom_call.1']
    %11 = vsyncpa [#allocation3], 0
    %s12 = scalar_lea.sflag [#allocation3], 1
    %13 = vsyncpa %s12, 0
    %14 = vsyncpa [#allocation6], 0
    %s15 = scalar_lea.sflag [#allocation6], 1
    %16 = vsyncpa %s15, 0
    %17 = vsyncpa [#allocation9], 0
    %s18 = scalar_lea.sflag [#allocation9], 1
    %19 = vsyncpa %s18, 0
    %20 = vsyncpa [#allocation4], 0
    %s21 = scalar_lea.sflag [#allocation4], 1
    %22 = vsyncpa %s21, 0
    %23 = vsyncpa [#allocation12], 0
    %s24 = scalar_lea.sflag [#allocation12], 1
    %25 = vsyncpa %s24, 0
    loop: start=0, step=1, limit=4
    $region2: #{tpu_custom_call.1} parent=1 // loop_pre_header
      _
    $region3: #{tpu_custom_call.1} parent=1 // loop_header
      %s27 = sphi 0, %s31
      %p28 = scmp.ge.s32.totalorder %s27, 4
      %s34 = sphi 0, %s46
      %s35 = sphi 0, %s42
      %s36 = sphi 0, %s34
      %s37 = sphi 0, %s35
      %s38 = sphi 0, %s36
      %s39 = sphi 0, %s37
      %s51 = sphi 0, %s53
      %s54 = sphi 0, %s51
      %s55 = sphi 0, %s54
      %s71 = sphi 0, %s55
      %s79 = sphi 0, %s81
      %s82 = sphi 0, %s79
      %s83 = sphi 0, %s82
      %s99 = sphi 0, %s83
      %s107 = sphi 0, %s109
      %s110 = sphi 0, %s107
      %s111 = sphi 0, %s110
      %s127 = sphi 0, %s111
      %s135 = sphi 0, %s137
      %s138 = sphi 0, %s135
      %s139 = sphi 0, %s138
      %s155 = sphi 0, %s139
      %s163 = sphi 0, %s165
      %s166 = sphi 0, %s163
      %s167 = sphi 0, %s166
      %s183 = sphi 0, %s167
      %s191 = sphi 0, %s193
      %s194 = sphi 0, %s191
      %s195 = sphi 0, %s194
      %s211 = sphi 0, %s195
    $region4: #{tpu_custom_call.1} parent=1 // loop_header_branch
      %30 = sbr.rel (%p28) target = $region8
    $region5: #{tpu_custom_call.1} parent=1 // loop_body
      %s32 = ssub.s32 %s27, 1
      %s33 = ssub.s32 %s27, 2
      %s40 = sadd.s32 1, %s35
      %p41 = scmp.ge.s32.totalorder %s40, 1
      %s42 = scalar_select %p41, 0, %s40
      %s43 = sadd.s32 1, %s34
      %s44 = scalar_select %p41, %s43, %s34
      %p45 = scmp.ge.s32.totalorder %s44, 2
      %s46 = scalar_select %p45, 0, %s44
      %s47 = ssub.s32 %s34, %s46
      %s48 = ssub.s32 %s35, %s42
      %s49 = sor.u32 %s47, %s48
      %p50 = scmp.eq.s32.totalorder %s49, 0
      %s52 = sadd.s32 %s51, 1
      %s53 = scalar_select %p50, %s51, %s52
      %p56 = pneg %p50
      %p57 = scmp.eq.s32.totalorder %s27, 1
      %p58 = por %p56, %p57
      %p59 = scmp.ne.s32.totalorder %s51, %s54
      %p60 = scmp.eq.s32.totalorder %s27, 0
      %p61 = por %p59, %p60
      %p62 = scmp.ne.s32.totalorder %s51, %s54
      %p63 = scmp.eq.s32.totalorder %s32, 1
      %p64 = por %p62, %p63
      %p65 = scmp.ne.s32.totalorder %s54, %s55
      %p66 = scmp.eq.s32.totalorder %s32, 0
      %p67 = por %p65, %p66
      %p68 = scmp.ne.s32.totalorder %s54, %s55
      %p69 = scmp.eq.s32.totalorder %s33, 1
      %p70 = por %p68, %p69
      %p72 = scmp.ne.s32.totalorder %s55, %s71
      %p73 = scmp.eq.s32.totalorder %s33, 0
      %p74 = por %p72, %p73
      %s75 = ssub.s32 %s34, %s46
      %s76 = ssub.s32 %s35, %s42
      %s77 = sor.u32 %s75, %s76
      %p78 = scmp.eq.s32.totalorder %s77, 0
      %s80 = sadd.s32 %s79, 1
      %s81 = scalar_select %p78, %s79, %s80
      %p84 = pneg %p78
      %p85 = scmp.eq.s32.totalorder %s27, 1
      %p86 = por %p84, %p85
      %p87 = scmp.ne.s32.totalorder %s79, %s82
      %p88 = scmp.eq.s32.totalorder %s27, 0
      %p89 = por %p87, %p88
      %p90 = scmp.ne.s32.totalorder %s79, %s82
      %p91 = scmp.eq.s32.totalorder %s32, 1
      %p92 = por %p90, %p91
      %p93 = scmp.ne.s32.totalorder %s82, %s83
      %p94 = scmp.eq.s32.totalorder %s32, 0
      %p95 = por %p93, %p94
      %p96 = scmp.ne.s32.totalorder %s82, %s83
      %p97 = scmp.eq.s32.totalorder %s33, 1
      %p98 = por %p96, %p97
      %p100 = scmp.ne.s32.totalorder %s83, %s99
      %p101 = scmp.eq.s32.totalorder %s33, 0
      %p102 = por %p100, %p101
      %s103 = ssub.s32 %s34, %s46
      %s104 = ssub.s32 %s35, %s42
      %s105 = sor.u32 %s103, %s104
      %p106 = scmp.eq.s32.totalorder %s105, 0
      %s108 = sadd.s32 %s107, 1
      %s109 = scalar_select %p106, %s107, %s108
      %p112 = pneg %p106
      %p113 = scmp.eq.s32.totalorder %s27, 1
      %p114 = por %p112, %p113
      %p115 = scmp.ne.s32.totalorder %s107, %s110
      %p116 = scmp.eq.s32.totalorder %s27, 0
      %p117 = por %p115, %p116
      %p118 = scmp.ne.s32.totalorder %s107, %s110
      %p119 = scmp.eq.s32.totalorder %s32, 1
      %p120 = por %p118, %p119
      %p121 = scmp.ne.s32.totalorder %s110, %s111
      %p122 = scmp.eq.s32.totalorder %s32, 0
      %p123 = por %p121, %p122
      %p124 = scmp.ne.s32.totalorder %s110, %s111
      %p125 = scmp.eq.s32.totalorder %s33, 1
      %p126 = por %p124, %p125
      %p128 = scmp.ne.s32.totalorder %s111, %s127
      %p129 = scmp.eq.s32.totalorder %s33, 0
      %p130 = por %p128, %p129
      %s131 = ssub.s32 %s34, %s46
      %s132 = ssub.s32 %s35, %s42
      %s133 = sor.u32 %s131, %s132
      %p134 = scmp.eq.s32.totalorder %s133, 0
      %s136 = sadd.s32 %s135, 1
      %s137 = scalar_select %p134, %s135, %s136
      %p140 = pneg %p134
      %p141 = scmp.eq.s32.totalorder %s27, 1
      %p142 = por %p140, %p141
      %p143 = scmp.ne.s32.totalorder %s135, %s138
      %p144 = scmp.eq.s32.totalorder %s27, 0
      %p145 = por %p143, %p144
      %p146 = scmp.ne.s32.totalorder %s135, %s138
      %p147 = scmp.eq.s32.totalorder %s32, 1
      %p148 = por %p146, %p147
      %p149 = scmp.ne.s32.totalorder %s138, %s139
      %p150 = scmp.eq.s32.totalorder %s32, 0
      %p151 = por %p149, %p150
      %p152 = scmp.ne.s32.totalorder %s138, %s139
      %p153 = scmp.eq.s32.totalorder %s33, 1
      %p154 = por %p152, %p153
      %p156 = scmp.ne.s32.totalorder %s139, %s155
      %p157 = scmp.eq.s32.totalorder %s33, 0
      %p158 = por %p156, %p157
      %s159 = ssub.s32 %s34, %s46
      %s160 = ssub.s32 %s35, %s42
      %s161 = sor.u32 %s159, %s160
      %p162 = scmp.eq.s32.totalorder %s161, 0
      %s164 = sadd.s32 %s163, 1
      %s165 = scalar_select %p162, %s163, %s164
      %p168 = pneg %p162
      %p169 = scmp.eq.s32.totalorder %s27, 1
      %p170 = por %p168, %p169
      %p171 = scmp.ne.s32.totalorder %s163, %s166
      %p172 = scmp.eq.s32.totalorder %s27, 0
      %p173 = por %p171, %p172
      %p174 = scmp.ne.s32.totalorder %s163, %s166
      %p175 = scmp.eq.s32.totalorder %s32, 1
      %p176 = por %p174, %p175
      %p177 = scmp.ne.s32.totalorder %s166, %s167
      %p178 = scmp.eq.s32.totalorder %s32, 0
      %p179 = por %p177, %p178
      %p180 = scmp.ne.s32.totalorder %s166, %s167
      %p181 = scmp.eq.s32.totalorder %s33, 1
      %p182 = por %p180, %p181
      %p184 = scmp.ne.s32.totalorder %s167, %s183
      %p185 = scmp.eq.s32.totalorder %s33, 0
      %p186 = por %p184, %p185
      %s187 = ssub.s32 %s34, %s46
      %s188 = ssub.s32 %s35, %s42
      %s189 = sor.u32 %s187, %s188
      %p190 = scmp.eq.s32.totalorder %s189, 0
      %s192 = sadd.s32 %s191, 1
      %s193 = scalar_select %p190, %s191, %s192
      %p196 = pneg %p190
      %p197 = scmp.eq.s32.totalorder %s27, 1
      %p198 = por %p196, %p197
      %p199 = scmp.ne.s32.totalorder %s191, %s194
      %p200 = scmp.eq.s32.totalorder %s27, 0
      %p201 = por %p199, %p200
      %p202 = scmp.ne.s32.totalorder %s191, %s194
      %p203 = scmp.eq.s32.totalorder %s32, 1
      %p204 = por %p202, %p203
      %p205 = scmp.ne.s32.totalorder %s194, %s195
      %p206 = scmp.eq.s32.totalorder %s32, 0
      %p207 = por %p205, %p206
      %p208 = scmp.ne.s32.totalorder %s194, %s195
      %p209 = scmp.eq.s32.totalorder %s33, 1
      %p210 = por %p208, %p209
      %p212 = scmp.ne.s32.totalorder %s195, %s211
      %p213 = scmp.eq.s32.totalorder %s33, 0
      %p214 = por %p212, %p213
      %p215 = scmp.le.s32.totalorder 1, %s27
      %p216 = scmp.lt.s32.totalorder %s27, 3
      %p217 = pnand %p215, %p216
      %p218 = pneg %p217
      // Predicated region
      $region9: #{tpu_custom_call.1} parent=5 // pred_check
        _
      $region10: #{tpu_custom_call.1} parent=5 // pred_check_branch
        %220 = sbr.rel (%p217) target = $region12
      $region11: #{tpu_custom_call.1} parent=5 // pred_region
        %s221 = ssub.s32 %s27, 1
      $region12: #{tpu_custom_call.1} parent=5 // pred_fallthru
        _
      %p222 = scmp.lt.s32.totalorder %s27, 2
      // Predicated region
      $region13: #{tpu_custom_call.1} parent=5 // pred_check
        %p223 = pneg %p222
      $region14: #{tpu_custom_call.1} parent=5 // pred_check_branch
        %225 = sbr.rel (%p223) target = $region16
      $region15: #{tpu_custom_call.1} parent=5 // pred_region
        // Predicated region
        $region17: #{tpu_custom_call.1} parent=15 // pred_check
          %p226 = pneg %p61
        $region18: #{tpu_custom_call.1} parent=15 // pred_check_branch
          %228 = sbr.rel (%p226) target = $region20
        $region19: #{tpu_custom_call.1} parent=15 // pred_region
          %s229 = sand.u32 %s51, 1
          %s230 = scalar_lea.sflag [#allocation3], %s229
          %s231 = sand.u32 %s51, 1
          %s232 = smul.addr %s231, 2
          %s233 = scalar_lea.vmem [#allocation2], %s232
          %s235 = ssub.s32 32, 32
          %236 = vsyncadd %s230, %s235
          %s237 = sadd.s32 %s35, %s34
          %s238 = smul.addr %s237, 32
          %s239 = scalar_lea.hbm %s0, %s238
          %s241 = sshll.u32 %s233, 4
          %s242 = int_to_ptr.vmem [resolvable:$true] %s241
          %244 = dma.hbm_to_vmem [thread:$0]  %s239, 32, %s242, %s230
        $region20: #{tpu_custom_call.1} parent=15 // pred_fallthru
          _
        // Predicated region
        $region21: #{tpu_custom_call.1} parent=15 // pred_check
          %p245 = pneg %p89
        $region22: #{tpu_custom_call.1} parent=15 // pred_check_branch
          %247 = sbr.rel (%p245) target = $region24
        $region23: #{tpu_custom_call.1} parent=15 // pred_region
          %s248 = sand.u32 %s27, 1
          %s249 = scalar_lea.sflag [#allocation6], %s248
          %s250 = sand.u32 %s79, 1
          %s251 = smul.addr %s250, 2
          %s252 = scalar_lea.vmem [#allocation5], %s251
          %s254 = ssub.s32 32, 32
          %255 = vsyncadd %s249, %s254
          %s256 = sadd.s32 %s35, %s34
          %s257 = smul.addr %s256, 32
          %s258 = scalar_lea.hbm %s1, %s257
          %s260 = sshll.u32 %s252, 4
          %s261 = int_to_ptr.vmem [resolvable:$true] %s260
          %263 = dma.hbm_to_vmem [thread:$0]  %s258, 32, %s261, %s249
        $region24: #{tpu_custom_call.1} parent=15 // pred_fallthru
          _
        // Predicated region
        $region25: #{tpu_custom_call.1} parent=15 // pred_check
          %p264 = pneg %p117
        $region26: #{tpu_custom_call.1} parent=15 // pred_check_branch
          %266 = sbr.rel (%p264) target = $region28
        $region27: #{tpu_custom_call.1} parent=15 // pred_region
          %s267 = sand.u32 %s27, 1
          %s268 = scalar_lea.sflag [#allocation6], %s267
          %s269 = sand.u32 %s107, 1
          %s270 = smul.addr %s269, 8
          %s271 = scalar_lea.vmem [#allocation7], %s270
          %s273 = ssub.s32 128, 128
          %274 = vsyncadd %s268, %s273
          %s275 = smul.addr %s34, 4
          %s276 = sadd.s32 %s35, %s275
          %s277 = smul.addr %s276, 32
          %s278 = scalar_lea.hbm %s2, %s277
          %s279 = sshll.u32 %s271, 4
          %s280 = int_to_ptr.vmem [resolvable:$true] %s279
          %285 = dma.hbm_to_vmem [thread:$0]  %s278, 128, %s280, %s268, 32, 32, 2
        $region28: #{tpu_custom_call.1} parent=15 // pred_fallthru
          _
        // Predicated region
        $region29: #{tpu_custom_call.1} parent=15 // pred_check
          %p286 = pneg %p145
        $region30: #{tpu_custom_call.1} parent=15 // pred_check_branch
          %288 = sbr.rel (%p286) target = $region32
        $region31: #{tpu_custom_call.1} parent=15 // pred_region
          %s289 = sand.u32 %s135, 1
          %s290 = scalar_lea.sflag [#allocation9], %s289
          %s291 = sand.u32 %s135, 1
          %s292 = smul.addr %s291, 8
          %s293 = scalar_lea.vmem [#allocation8], %s292
          %s295 = ssub.s32 128, 128
          %296 = vsyncadd %s290, %s295
          %s297 = smul.addr %s34, 4
          %s298 = sadd.s32 %s35, %s297
          %s299 = smul.addr %s298, 32
          %s300 = scalar_lea.hbm %s3, %s299
          %s301 = sshll.u32 %s293, 4
          %s302 = int_to_ptr.vmem [resolvable:$true] %s301
          %307 = dma.hbm_to_vmem [thread:$0]  %s300, 128, %s302, %s290, 32, 32, 2
        $region32: #{tpu_custom_call.1} parent=15 // pred_fallthru
          _
      $region16: #{tpu_custom_call.1} parent=5 // pred_fallthru
        _
      %p308 = scmp.le.s32.totalorder 1, %s27
      %p309 = scmp.lt.s32.totalorder %s27, 3
      %p310 = pnand %p308, %p309
      %p311 = pneg %p310
      // Predicated region
      $region33: #{tpu_custom_call.1} parent=5 // pred_check
        _
      $region34: #{tpu_custom_call.1} parent=5 // pred_check_branch
        %313 = sbr.rel (%p310) target = $region36
      $region35: #{tpu_custom_call.1} parent=5 // pred_region
        %s314 = ssub.s32 %s27, 1
        %s315 = sand.u32 %s54, 1
        %s316 = scalar_lea.sflag [#allocation3], %s315
        %s317 = sand.u32 %s54, 1
        %s318 = smul.addr %s317, 2
        %s319 = scalar_lea.vmem [#allocation2], %s318
        // Predicated region
        $region37: #{tpu_custom_call.1} parent=35 // pred_check
          %p320 = pneg %p67
        $region38: #{tpu_custom_call.1} parent=35 // pred_check_branch
          %322 = sbr.rel (%p320) target = $region40
        $region39: #{tpu_custom_call.1} parent=35 // pred_region
          %323 = dma.done %s316, 32
        $region40: #{tpu_custom_call.1} parent=35 // pred_fallthru
          _
        %s324 = sand.u32 %s32, 1
        %s325 = scalar_lea.sflag [#allocation6], %s324
        %s326 = sand.u32 %s82, 1
        %s327 = smul.addr %s326, 2
        %s328 = scalar_lea.vmem [#allocation5], %s327
        // Predicated region
        $region41: #{tpu_custom_call.1} parent=35 // pred_check
          %p329 = pneg %p95
        $region42: #{tpu_custom_call.1} parent=35 // pred_check_branch
          %331 = sbr.rel (%p329) target = $region44
        $region43: #{tpu_custom_call.1} parent=35 // pred_region
          %332 = dma.done %s325, 32
        $region44: #{tpu_custom_call.1} parent=35 // pred_fallthru
          _
        %s333 = sand.u32 %s32, 1
        %s334 = scalar_lea.sflag [#allocation6], %s333
        %s335 = sand.u32 %s110, 1
        %s336 = smul.addr %s335, 8
        %s337 = scalar_lea.vmem [#allocation7], %s336
        // Predicated region
        $region45: #{tpu_custom_call.1} parent=35 // pred_check
          %p338 = pneg %p123
        $region46: #{tpu_custom_call.1} parent=35 // pred_check_branch
          %340 = sbr.rel (%p338) target = $region48
        $region47: #{tpu_custom_call.1} parent=35 // pred_region
          %341 = dma.done %s334, 128
        $region48: #{tpu_custom_call.1} parent=35 // pred_fallthru
          _
        %s342 = sand.u32 %s138, 1
        %s343 = scalar_lea.sflag [#allocation9], %s342
        %s344 = sand.u32 %s138, 1
        %s345 = smul.addr %s344, 8
        %s346 = scalar_lea.vmem [#allocation8], %s345
        // Predicated region
        $region49: #{tpu_custom_call.1} parent=35 // pred_check
          %p347 = pneg %p151
        $region50: #{tpu_custom_call.1} parent=35 // pred_check_branch
          %349 = sbr.rel (%p347) target = $region52
        $region51: #{tpu_custom_call.1} parent=35 // pred_region
          %350 = dma.done %s343, 128
        $region52: #{tpu_custom_call.1} parent=35 // pred_fallthru
          _
        %s351 = sand.u32 %s54, 1
        %s352 = scalar_lea.sflag [#allocation3], %s351
        %s353 = sand.u32 %s54, 1
        %s354 = smul.addr %s353, 2
        %s355 = scalar_lea.vmem [#allocation2], %s354
        %p356 = pneg %p67
        %p357 = pneg %p64
        %s358 = sand.u32 %s32, 1
        %s359 = scalar_lea.sflag [#allocation6], %s358
        %s360 = sand.u32 %s82, 1
        %s361 = smul.addr %s360, 2
        %s362 = scalar_lea.vmem [#allocation5], %s361
        %p363 = pneg %p95
        %p364 = pneg %p92
        %s365 = sand.u32 %s32, 1
        %s366 = scalar_lea.sflag [#allocation6], %s365
        %s367 = sand.u32 %s110, 1
        %s368 = smul.addr %s367, 8
        %s369 = scalar_lea.vmem [#allocation7], %s368
        %p370 = pneg %p123
        %p371 = pneg %p120
        %s372 = sand.u32 %s138, 1
        %s373 = scalar_lea.sflag [#allocation9], %s372
        %s374 = sand.u32 %s138, 1
        %s375 = smul.addr %s374, 8
        %s376 = scalar_lea.vmem [#allocation8], %s375
        %p377 = pneg %p151
        %p378 = pneg %p148
        %p379 = pneg %p179
        %p380 = pneg %p176
        %s381 = sand.u32 %s166, 1
        %s382 = scalar_lea.sflag [#allocation4], %s381
        %s383 = sand.u32 %s166, 1
        %s384 = smul.addr %s383, 8
        %s385 = scalar_lea.vmem [#allocation10], %s384
        %p386 = pneg %p207
        %p387 = pneg %p204
        %s388 = sand.u32 %s194, 1
        %s389 = scalar_lea.sflag [#allocation12], %s388
        %s390 = sand.u32 %s194, 1
        %s391 = smul.addr %s390, 8
        %s392 = scalar_lea.vmem [#allocation11], %s391
        %v393 = vld [vmem:[%s319] sm:$0x3]
        %v394 = vld [vmem:[%s328] sm:$0x3]
        %v395 = vlaneseq
        %v396 = vand.u32 %v395, 127
        %vm397 = vcmp.lt.s32.totalorder %v396, 0
        %v398 = vsub.s32 0, %v396
        %v399 = vsel %vm397, %v398, %v396
        %v400 = vshrl.u32 %v399, 5
        %v401 = vand.u32 %v399, 31
        %v402 = vsub.s32 0, %v401
        %v403 = vsel %vm397, %v402, %v401
        %vm404 = vcmp.ne.s32.totalorder %v403, 0
        %vm405 = vcmp.lt.s32.totalorder %v403, 0
        %vm406 = vmand %vm405, %vm404
        %v407 = vadd.s32 %v403, 32
        %v408 = vsel %vm406, %v407, %v403
        %vm409 = vcmp.lt.s32.totalorder %v408, 16
        %v410 = vld [vmem:[%s337] sm:$0x3]
        %v411 = vld [vmem:[%s337 + $0x2] sm:$0x3]
        %v412 = vld [vmem:[%s337 + $0x4] sm:$0x3]
        %v413 = vld [vmem:[%s337 + $0x6] sm:$0x3]
        %414 = vrot.lane.b32.xlu0 %v410, 112
        %v415 = vpop.permute.xlu0 %414
        %416 = vrot.lane.b32.xlu0 %v411, 112
        %v417 = vpop.permute.xlu0 %416
        %418 = vrot.lane.b32.xlu0 %v412, 112
        %v419 = vpop.permute.xlu0 %418
        %420 = vrot.lane.b32.xlu0 %v413, 112
        %v421 = vpop.permute.xlu0 %420
        %422 = vrot.lane.b32.xlu0 %v410, 16
        %v423 = vpop.permute.xlu0 %422
        %424 = vrot.lane.b32.xlu0 %v411, 16
        %v425 = vpop.permute.xlu0 %424
        %426 = vrot.lane.b32.xlu0 %v412, 16
        %v427 = vpop.permute.xlu0 %426
        %428 = vrot.lane.b32.xlu0 %v413, 16
        %v429 = vpop.permute.xlu0 %428
        %v430 = vsel %vm409, 1, 0
        %vm431 = vcmp.eq.s32.totalorder %v430, 1
        %v432 = vsel %vm431, %v415, %v423
        %v433 = vsel %vm431, %v417, %v425
        %v434 = vsel %vm431, %v419, %v427
        %v435 = vsel %vm431, %v421, %v429
        %v436 = vmul.f32 %v410, %v393
        %v437 = vmul.f32 %v411, %v393
        %v438 = vmul.f32 %v412, %v393
        %v439 = vmul.f32 %v413, %v393
        %v440 = vmul.f32 %v432, %v394
        %v441 = vmul.f32 %v433, %v394
        %v442 = vmul.f32 %v434, %v394
        %v443 = vmul.f32 %v435, %v394
        %v444 = vadd.f32 %v436, %v440
        %v445 = vadd.f32 %v437, %v441
        %v446 = vadd.f32 %v438, %v442
        %v447 = vadd.f32 %v439, %v443
        %448 = vst [vmem:[%s385] sm:$0x3] %v444
        %449 = vst [vmem:[%s385 + $0x2] sm:$0x3] %v445
        %450 = vst [vmem:[%s385 + $0x4] sm:$0x3] %v446
        %451 = vst [vmem:[%s385 + $0x6] sm:$0x3] %v447
        %v452 = vld [vmem:[%s346] sm:$0x3]
        %v453 = vld [vmem:[%s346 + $0x2] sm:$0x3]
        %v454 = vld [vmem:[%s346 + $0x4] sm:$0x3]
        %v455 = vld [vmem:[%s346 + $0x6] sm:$0x3]
        %456 = vrot.lane.b32.xlu0 %v452, 112
        %v457 = vpop.permute.xlu0 %456
        %458 = vrot.lane.b32.xlu0 %v453, 112
        %v459 = vpop.permute.xlu0 %458
        %460 = vrot.lane.b32.xlu0 %v454, 112
        %v461 = vpop.permute.xlu0 %460
        %462 = vrot.lane.b32.xlu0 %v455, 112
        %v463 = vpop.permute.xlu0 %462
        %464 = vrot.lane.b32.xlu0 %v452, 16
        %v465 = vpop.permute.xlu0 %464
        %466 = vrot.lane.b32.xlu0 %v453, 16
        %v467 = vpop.permute.xlu0 %466
        %468 = vrot.lane.b32.xlu0 %v454, 16
        %v469 = vpop.permute.xlu0 %468
        %470 = vrot.lane.b32.xlu0 %v455, 16
        %v471 = vpop.permute.xlu0 %470
        %v472 = vsel %vm431, %v457, %v465
        %v473 = vsel %vm431, %v459, %v467
        %v474 = vsel %vm431, %v461, %v469
        %v475 = vsel %vm431, %v463, %v471
        %v476 = vmul.f32 %v452, %v393
        %v477 = vmul.f32 %v453, %v393
        %v478 = vmul.f32 %v454, %v393
        %v479 = vmul.f32 %v455, %v393
        %v480 = vmul.f32 %v472, %v394
        %v481 = vmul.f32 %v473, %v394
        %v482 = vmul.f32 %v474, %v394
        %v483 = vmul.f32 %v475, %v394
        %v484 = vadd.f32 %v476, %v480
        %v485 = vadd.f32 %v477, %v481
        %v486 = vadd.f32 %v478, %v482
        %v487 = vadd.f32 %v479, %v483
        %488 = vst [vmem:[%s392] sm:$0x3] %v484
        %489 = vst [vmem:[%s392 + $0x2] sm:$0x3] %v485
        %490 = vst [vmem:[%s392 + $0x4] sm:$0x3] %v486
        %491 = vst [vmem:[%s392 + $0x6] sm:$0x3] %v487
        %s492 = sand.u32 %s166, 1
        %s493 = scalar_lea.sflag [#allocation4], %s492
        %s494 = sand.u32 %s166, 1
        %s495 = smul.addr %s494, 8
        %s496 = scalar_lea.vmem [#allocation10], %s495
        %s497 = sand.u32 %s194, 1
        %s498 = scalar_lea.sflag [#allocation12], %s497
        %s499 = sand.u32 %s194, 1
        %s500 = smul.addr %s499, 8
        %s501 = scalar_lea.vmem [#allocation11], %s500
        // Predicated region
        $region53: #{tpu_custom_call.1} parent=35 // pred_check
          %p502 = pneg %p176
        $region54: #{tpu_custom_call.1} parent=35 // pred_check_branch
          %504 = sbr.rel (%p502) target = $region56
        $region55: #{tpu_custom_call.1} parent=35 // pred_region
          %s506 = ssub.s32 128, 128
          %507 = vsyncadd %s493, %s506
          %s508 = smul.addr %s36, 4
          %s509 = sadd.s32 %s37, %s508
          %s510 = smul.addr %s509, 32
          %s511 = scalar_lea.hbm %s4, %s510
          %s512 = sshll.u32 %s496, 4
          %s513 = int_to_ptr.vmem [resolvable:$true] %s512
          %518 = dma.vmem_to_hbm [thread:$0]  %s513, 128, %s511, %s493, 32, 32, 2
        $region56: #{tpu_custom_call.1} parent=35 // pred_fallthru
          _
        // Predicated region
        $region57: #{tpu_custom_call.1} parent=35 // pred_check
          %p519 = pneg %p204
        $region58: #{tpu_custom_call.1} parent=35 // pred_check_branch
          %521 = sbr.rel (%p519) target = $region60
        $region59: #{tpu_custom_call.1} parent=35 // pred_region
          %s523 = ssub.s32 128, 128
          %524 = vsyncadd %s498, %s523
          %s525 = smul.addr %s36, 4
          %s526 = sadd.s32 %s37, %s525
          %s527 = smul.addr %s526, 32
          %s528 = scalar_lea.hbm %s5, %s527
          %s529 = sshll.u32 %s501, 4
          %s530 = int_to_ptr.vmem [resolvable:$true] %s529
          %535 = dma.vmem_to_hbm [thread:$0]  %s530, 128, %s528, %s498, 32, 32, 2
        $region60: #{tpu_custom_call.1} parent=35 // pred_fallthru
          _
      $region36: #{tpu_custom_call.1} parent=5 // pred_fallthru
        _
      %p536 = scmp.le.s32.totalorder 2, %s27
      // Predicated region
      $region61: #{tpu_custom_call.1} parent=5 // pred_check
        %p537 = pneg %p536
      $region62: #{tpu_custom_call.1} parent=5 // pred_check_branch
        %539 = sbr.rel (%p537) target = $region64
      $region63: #{tpu_custom_call.1} parent=5 // pred_region
        %s540 = ssub.s32 %s27, 2
        // Predicated region
        $region65: #{tpu_custom_call.1} parent=63 // pred_check
          %p541 = pneg %p182
        $region66: #{tpu_custom_call.1} parent=63 // pred_check_branch
          %543 = sbr.rel (%p541) target = $region68
        $region67: #{tpu_custom_call.1} parent=63 // pred_region
          %s544 = sand.u32 %s167, 1
          %s545 = scalar_lea.sflag [#allocation4], %s544
          %s546 = sand.u32 %s167, 1
          %s547 = smul.addr %s546, 8
          %s548 = scalar_lea.vmem [#allocation10], %s547
          %549 = dma.done %s545, 128
        $region68: #{tpu_custom_call.1} parent=63 // pred_fallthru
          _
        // Predicated region
        $region69: #{tpu_custom_call.1} parent=63 // pred_check
          %p550 = pneg %p210
        $region70: #{tpu_custom_call.1} parent=63 // pred_check_branch
          %552 = sbr.rel (%p550) target = $region72
        $region71: #{tpu_custom_call.1} parent=63 // pred_region
          %s553 = sand.u32 %s195, 1
          %s554 = scalar_lea.sflag [#allocation12], %s553
          %s555 = sand.u32 %s195, 1
          %s556 = smul.addr %s555, 8
          %s557 = scalar_lea.vmem [#allocation11], %s556
          %558 = dma.done %s554, 128
        $region72: #{tpu_custom_call.1} parent=63 // pred_fallthru
          _
      $region64: #{tpu_custom_call.1} parent=5 // pred_fallthru
        _
    $region6: #{tpu_custom_call.1} parent=1 // loop_footer
      %s31 = sadd.s32 1, %s27
    $region7: #{tpu_custom_call.1} parent=1 // loop_footer_branch
      %26 = sbr.rel target = $region3
    $region8: #{tpu_custom_call.1} parent=1 // loop_exit
      _
    %559 = vsyncpa [#allocation3], 1
    %s560 = scalar_lea.sflag [#allocation3], 1
    %561 = vsyncpa %s560, 1
    %562 = vsyncpa [#allocation6], 1
    %s563 = scalar_lea.sflag [#allocation6], 1
    %564 = vsyncpa %s563, 1
    %565 = vsyncpa [#allocation9], 1
    %s566 = scalar_lea.sflag [#allocation9], 1
    %567 = vsyncpa %s566, 1
    %568 = vsyncpa [#allocation4], 1
    %s569 = scalar_lea.sflag [#allocation4], 1
    %570 = vsyncpa %s569, 1
    %571 = vsyncpa [#allocation12], 1
    %s572 = scalar_lea.sflag [#allocation12], 1
    %573 = vsyncpa %s572, 1

</llo_original>
